<compile_context>
chip_gen: v7x
topology: tpu7x:2x2x1
jax: 0.10.0
libtpu: 0.0.40
codegen_flags: <defaults>
</compile_context>

<pallas_src>
import functools

import jax
import jax.numpy as jnp
from jax.experimental import pallas as pl
from jax.experimental.pallas import tpu as pltpu


NEG_SLOPE = 0.01  # nn.LeakyReLU() default


def encoder_region_kernel(x_ref, w1_ref, b1_ref, w2_ref, b2_ref, o_ref,
                          *, ub, dh, du):
    """One grid step == UB units of the 2-layer per-unit MLP."""
    x = x_ref[...]                                    # (B, din)

    # Layer 1: one wide matmul covering all UB units of this tile (x is shared).
    h = jnp.dot(x, w1_ref[...], preferred_element_type=jnp.float32)  # (B, UB*dh)
    h = h + b1_ref[...]                               # (1, UB*dh) broadcasts
    h = jnp.where(h >= 0, h, NEG_SLOPE * h)           # LeakyReLU

    # Layer 2: block-diagonal (per-unit) matmuls, unrolled over the tile.
    ys = []
    for u in range(ub):
        hu = h[:, u * dh:(u + 1) * dh]                # (B, dh) static slice
        yu = jnp.dot(hu, w2_ref[u], preferred_element_type=jnp.float32)
        ys.append(yu + b2_ref[u])                     # (B, du)
    y = jnp.concatenate(ys, axis=-1)                  # (B, UB*du) lane-dense

    # NOTE: if inputs are ever bf16 this final cast drops the f32 accumulation.
    o_ref[...] = y.astype(o_ref.dtype)


def _choose_units_per_step(num_units, dh, du, max_ub=32):
    """How many units each grid step processes.

    Prefer tiles whose last-dim block sizes are multiples of 128 (lane-dense W1
    slab + unmasked output store) and that leave >=2 grid steps (v7x megacore);
    otherwise fall back to a single full tile, which is always a legal block.
    """
    candidates = []
    for ub in range(1, min(num_units, max_ub) + 1):
        if num_units % ub:
            continue
        if ub % 8 == 0 and (ub * dh) % 128 == 0 and (ub * du) % 128 == 0:
            candidates.append(ub)
    if not candidates:
        return num_units
    return max(candidates, key=lambda c: ((num_units // c) >= 2, c))


def encoder_region(x, w1, b1, w2, b2, units_per_step=None):
    """
    x:  (B, dim_inputs)
    w1: (num_units, dim_inputs, dim_hidden), b1: (num_units, dim_hidden)
    w2: (num_units, dim_hidden, dim_unit),   b2: (num_units, dim_unit)
    returns: (B, num_units, dim_unit)
    """
    B, din = x.shape
    num_units, _, dh = w1.shape
    du = w2.shape[-1]

    ub = (units_per_step if units_per_step is not None
          else _choose_units_per_step(num_units, dh, du))
    assert num_units % ub == 0, "units_per_step must divide num_units"
    num_tiles = num_units // ub

    # One-time weight layout transform: layer-1 weights as a (din, U*dh) slab
    # so each grid step does a single wide matmul (x is shared across units).
    w1_slab = jnp.transpose(w1, (1, 0, 2)).reshape(din, num_units * dh)
    b1_slab = b1.reshape(1, num_units * dh)

    kernel = functools.partial(encoder_region_kernel, ub=ub, dh=dh, du=du)

    flops = 2 * B * num_units * (din * dh + dh * du)
    out_bytes = B * num_units * du * x.dtype.itemsize
    bytes_accessed = (x.nbytes + w1.nbytes + b1.nbytes + w2.nbytes + b2.nbytes
                      + out_bytes)

    out_flat = pl.pallas_call(
        kernel,
        out_shape=jax.ShapeDtypeStruct((B, num_units * du), x.dtype),
        grid_spec=pltpu.PrefetchScalarGridSpec(
            num_scalar_prefetch=0,
            grid=(num_tiles,),
            in_specs=[
                pl.BlockSpec((B, din), lambda t: (0, 0)),          # x (shared)
                pl.BlockSpec((din, ub * dh), lambda t: (0, t)),    # W1 slab tile
                pl.BlockSpec((1, ub * dh), lambda t: (0, t)),      # b1 slab tile
                pl.BlockSpec((ub, dh, du), lambda t: (t, 0, 0)),   # W2 tile
                pl.BlockSpec((ub, du), lambda t: (t, 0)),          # b2 tile
            ],
            out_specs=pl.BlockSpec((B, ub * du), lambda t: (0, t)),
        ),
        compiler_params=pltpu.CompilerParams(
            dimension_semantics=("parallel",),
            vmem_limit_bytes=48 * 1024 * 1024,   # stays under v7x's 64 MiB VMEM
        ),
        cost_estimate=pl.CostEstimate(
            flops=flops, transcendentals=0, bytes_accessed=bytes_accessed),
    )(x, w1_slab, b1_slab, w2, b2)

    # (B, U*du) -> (B, U, du): pure reshape, no HBM transpose pass.
    return out_flat.reshape(B, num_units, du)


def encoder_region_ref(x, w1, b1, w2, b2):
    """Pure-JAX reference mirroring the PyTorch forward."""
    B = x.shape[0]
    num_units = w1.shape[0]
    xe = jnp.broadcast_to(x[:, None, :], (B, num_units, x.shape[1]))
    h = jnp.einsum("bui,uio->buo", xe, w1) + b1[None]
    h = jnp.where(h >= 0, h, NEG_SLOPE * h)
    y = jnp.einsum("buh,uho->buo", h, w2) + b2[None]
    return y


if __name__ == "__main__":
    # Small shapes consistent with the module (UB=8 -> 2 grid tiles, 128-lane store)
    B = 2
    num_units = 16
    dim_inputs = 32
    dim_hidden = 32
    dim_unit = 16

    key = jax.random.PRNGKey(0)
    kx, k1, k2, k3, k4 = jax.random.split(key, 5)

    x = jax.random.normal(kx, (B, dim_inputs), dtype=jnp.float32)
    # Deterministic synthetic parameters (UnitWiseLinear: per-unit weight + bias)
    w1 = jax.random.normal(k1, (num_units, dim_inputs, dim_hidden), jnp.float32) * 0.1
    b1 = jax.random.normal(k2, (num_units, dim_hidden), jnp.float32) * 0.1
    w2 = jax.random.normal(k3, (num_units, dim_hidden, dim_unit), jnp.float32) * 0.1
    b2 = jax.random.normal(k4, (num_units, dim_unit), jnp.float32) * 0.1

    out = jax.block_until_ready(encoder_region(x, w1, b1, w2, b2))
    ref = encoder_region_ref(x, w1, b1, w2, b2)

    assert out.shape == (B, num_units, dim_unit)
    assert jnp.allclose(out, ref, atol=1e-5, rtol=1e-5), \
        float(jnp.abs(out - ref).max())

    print("KERNEL_OK")
</pallas_src>

<mosaic_0001>
module attributes {stable_mosaic.version = 11 : i64} {
  func.func @encoder_region_kernel(%arg0: i32, %arg1: memref<2x32xf32, #tpu.memory_space<vmem>>, %arg2: memref<32x256xf32, #tpu.memory_space<vmem>>, %arg3: memref<1x256xf32, #tpu.memory_space<vmem>>, %arg4: memref<8x32x16xf32, #tpu.memory_space<vmem>>, %arg5: memref<8x16xf32, #tpu.memory_space<vmem>>, %arg6: memref<2x128xf32, #tpu.memory_space<vmem>>) attributes {dimension_semantics = [#tpu.dimension_semantics<parallel>], iteration_bounds = array<i64: 2>, scalar_prefetch = 0 : i64, scratch_operands = 0 : i64, tpu.core_type = #tpu.core_type<tc>, window_params = [{pipeline_mode = #tpu.pipeline_mode<synchronous>, transform_indices = @transform_0, window_bounds = array<i64: 2, 32>}, {transform_indices = @transform_1, window_bounds = array<i64: 32, 256>}, {transform_indices = @transform_2, window_bounds = array<i64: 1, 256>}, {transform_indices = @transform_3, window_bounds = array<i64: 8, 32, 16>}, {transform_indices = @transform_4, window_bounds = array<i64: 8, 16>}, {transform_indices = @transform_5, window_bounds = array<i64: 2, 128>}]} {
    %c0 = arith.constant 0 : index
    %c0_0 = arith.constant 0 : index
    %0 = vector.load %arg1[%c0, %c0_0] : memref<2x32xf32, #tpu.memory_space<vmem>>, vector<2x32xf32>
    %c0_1 = arith.constant 0 : index
    %c0_2 = arith.constant 0 : index
    %1 = vector.load %arg2[%c0_1, %c0_2] : memref<32x256xf32, #tpu.memory_space<vmem>>, vector<32x256xf32>
    %cst = arith.constant dense<0.000000e+00> : vector<2x256xf32>
    %2 = tpu.matmul %0, %1, %cst {dimension_numbers = #tpu.dot_dimension_numbers<[1], [0], [0], [1], [0, 0, 1, 1], [], []>} : vector<2x32xf32>, vector<32x256xf32>, vector<2x256xf32> -> vector<2x256xf32>
    %c0_3 = arith.constant 0 : index
    %c0_4 = arith.constant 0 : index
    %3 = vector.load %arg3[%c0_3, %c0_4] : memref<1x256xf32, #tpu.memory_space<vmem>>, vector<1x256xf32>
    %4 = vector.broadcast %3 : vector<1x256xf32> to vector<2x256xf32>
    %5 = arith.addf %2, %4 : vector<2x256xf32>
    %cst_5 = arith.constant 0.000000e+00 : f32
    %6 = vector.broadcast %cst_5 : f32 to vector<2x256xf32>
    %7 = arith.cmpf oge, %5, %6 : vector<2x256xf32>
    %cst_6 = arith.constant 0.00999999977 : f32
    %8 = vector.broadcast %cst_6 : f32 to vector<2x256xf32>
    %9 = arith.mulf %8, %5 : vector<2x256xf32>
    %10 = arith.select %7, %5, %9 : vector<2x256xi1>, vector<2x256xf32>
    %11 = vector.extract_strided_slice %10 {offsets = [0, 0], sizes = [2, 32], strides = [1, 1]} : vector<2x256xf32> to vector<2x32xf32>
    %c0_7 = arith.constant 0 : index
    %c0_8 = arith.constant 0 : index
    %c0_9 = arith.constant 0 : index
    %12 = vector.load %arg4[%c0_7, %c0_8, %c0_9] : memref<8x32x16xf32, #tpu.memory_space<vmem>>, vector<1x32x16xf32>
    %13 = vector.shape_cast %12 : vector<1x32x16xf32> to vector<32x16xf32>
    %cst_10 = arith.constant dense<0.000000e+00> : vector<2x16xf32>
    %14 = tpu.matmul %11, %13, %cst_10 {dimension_numbers = #tpu.dot_dimension_numbers<[1], [0], [0], [1], [0, 0, 1, 1], [], []>} : vector<2x32xf32>, vector<32x16xf32>, vector<2x16xf32> -> vector<2x16xf32>
    %c0_11 = arith.constant 0 : index
    %c0_12 = arith.constant 0 : index
    %15 = vector.load %arg5[%c0_11, %c0_12] : memref<8x16xf32, #tpu.memory_space<vmem>>, vector<1x16xf32>
    %16 = vector.shape_cast %15 : vector<1x16xf32> to vector<16xf32>
    %17 = vector.shape_cast %16 : vector<16xf32> to vector<1x16xf32>
    %18 = vector.broadcast %17 : vector<1x16xf32> to vector<2x16xf32>
    %19 = arith.addf %14, %18 : vector<2x16xf32>
    %20 = vector.extract_strided_slice %10 {offsets = [0, 32], sizes = [2, 32], strides = [1, 1]} : vector<2x256xf32> to vector<2x32xf32>
    %c1 = arith.constant 1 : index
    %c0_13 = arith.constant 0 : index
    %c0_14 = arith.constant 0 : index
    %21 = vector.load %arg4[%c1, %c0_13, %c0_14] : memref<8x32x16xf32, #tpu.memory_space<vmem>>, vector<1x32x16xf32>
    %22 = vector.shape_cast %21 : vector<1x32x16xf32> to vector<32x16xf32>
    %cst_15 = arith.constant dense<0.000000e+00> : vector<2x16xf32>
    %23 = tpu.matmul %20, %22, %cst_15 {dimension_numbers = #tpu.dot_dimension_numbers<[1], [0], [0], [1], [0, 0, 1, 1], [], []>} : vector<2x32xf32>, vector<32x16xf32>, vector<2x16xf32> -> vector<2x16xf32>
    %c1_16 = arith.constant 1 : index
    %c0_17 = arith.constant 0 : index
    %24 = vector.load %arg5[%c1_16, %c0_17] : memref<8x16xf32, #tpu.memory_space<vmem>>, vector<1x16xf32>
    %25 = vector.shape_cast %24 : vector<1x16xf32> to vector<16xf32>
    %26 = vector.shape_cast %25 : vector<16xf32> to vector<1x16xf32>
    %27 = vector.broadcast %26 : vector<1x16xf32> to vector<2x16xf32>
    %28 = arith.addf %23, %27 : vector<2x16xf32>
    %29 = vector.extract_strided_slice %10 {offsets = [0, 64], sizes = [2, 32], strides = [1, 1]} : vector<2x256xf32> to vector<2x32xf32>
    %c2 = arith.constant 2 : index
    %c0_18 = arith.constant 0 : index
    %c0_19 = arith.constant 0 : index
    %30 = vector.load %arg4[%c2, %c0_18, %c0_19] : memref<8x32x16xf32, #tpu.memory_space<vmem>>, vector<1x32x16xf32>
    %31 = vector.shape_cast %30 : vector<1x32x16xf32> to vector<32x16xf32>
    %cst_20 = arith.constant dense<0.000000e+00> : vector<2x16xf32>
    %32 = tpu.matmul %29, %31, %cst_20 {dimension_numbers = #tpu.dot_dimension_numbers<[1], [0], [0], [1], [0, 0, 1, 1], [], []>} : vector<2x32xf32>, vector<32x16xf32>, vector<2x16xf32> -> vector<2x16xf32>
    %c2_21 = arith.constant 2 : index
    %c0_22 = arith.constant 0 : index
    %33 = vector.load %arg5[%c2_21, %c0_22] : memref<8x16xf32, #tpu.memory_space<vmem>>, vector<1x16xf32>
    %34 = vector.shape_cast %33 : vector<1x16xf32> to vector<16xf32>
    %35 = vector.shape_cast %34 : vector<16xf32> to vector<1x16xf32>
    %36 = vector.broadcast %35 : vector<1x16xf32> to vector<2x16xf32>
    %37 = arith.addf %32, %36 : vector<2x16xf32>
    %38 = vector.extract_strided_slice %10 {offsets = [0, 96], sizes = [2, 32], strides = [1, 1]} : vector<2x256xf32> to vector<2x32xf32>
    %c3 = arith.constant 3 : index
    %c0_23 = arith.constant 0 : index
    %c0_24 = arith.constant 0 : index
    %39 = vector.load %arg4[%c3, %c0_23, %c0_24] : memref<8x32x16xf32, #tpu.memory_space<vmem>>, vector<1x32x16xf32>
    %40 = vector.shape_cast %39 : vector<1x32x16xf32> to vector<32x16xf32>
    %cst_25 = arith.constant dense<0.000000e+00> : vector<2x16xf32>
    %41 = tpu.matmul %38, %40, %cst_25 {dimension_numbers = #tpu.dot_dimension_numbers<[1], [0], [0], [1], [0, 0, 1, 1], [], []>} : vector<2x32xf32>, vector<32x16xf32>, vector<2x16xf32> -> vector<2x16xf32>
    %c3_26 = arith.constant 3 : index
    %c0_27 = arith.constant 0 : index
    %42 = vector.load %arg5[%c3_26, %c0_27] : memref<8x16xf32, #tpu.memory_space<vmem>>, vector<1x16xf32>
    %43 = vector.shape_cast %42 : vector<1x16xf32> to vector<16xf32>
    %44 = vector.shape_cast %43 : vector<16xf32> to vector<1x16xf32>
    %45 = vector.broadcast %44 : vector<1x16xf32> to vector<2x16xf32>
    %46 = arith.addf %41, %45 : vector<2x16xf32>
    %47 = vector.extract_strided_slice %10 {offsets = [0, 128], sizes = [2, 32], strides = [1, 1]} : vector<2x256xf32> to vector<2x32xf32>
    %c4 = arith.constant 4 : index
    %c0_28 = arith.constant 0 : index
    %c0_29 = arith.constant 0 : index
    %48 = vector.load %arg4[%c4, %c0_28, %c0_29] : memref<8x32x16xf32, #tpu.memory_space<vmem>>, vector<1x32x16xf32>
    %49 = vector.shape_cast %48 : vector<1x32x16xf32> to vector<32x16xf32>
    %cst_30 = arith.constant dense<0.000000e+00> : vector<2x16xf32>
    %50 = tpu.matmul %47, %49, %cst_30 {dimension_numbers = #tpu.dot_dimension_numbers<[1], [0], [0], [1], [0, 0, 1, 1], [], []>} : vector<2x32xf32>, vector<32x16xf32>, vector<2x16xf32> -> vector<2x16xf32>
    %c4_31 = arith.constant 4 : index
    %c0_32 = arith.constant 0 : index
    %51 = vector.load %arg5[%c4_31, %c0_32] : memref<8x16xf32, #tpu.memory_space<vmem>>, vector<1x16xf32>
    %52 = vector.shape_cast %51 : vector<1x16xf32> to vector<16xf32>
    %53 = vector.shape_cast %52 : vector<16xf32> to vector<1x16xf32>
    %54 = vector.broadcast %53 : vector<1x16xf32> to vector<2x16xf32>
    %55 = arith.addf %50, %54 : vector<2x16xf32>
    %56 = vector.extract_strided_slice %10 {offsets = [0, 160], sizes = [2, 32], strides = [1, 1]} : vector<2x256xf32> to vector<2x32xf32>
    %c5 = arith.constant 5 : index
    %c0_33 = arith.constant 0 : index
    %c0_34 = arith.constant 0 : index
    %57 = vector.load %arg4[%c5, %c0_33, %c0_34] : memref<8x32x16xf32, #tpu.memory_space<vmem>>, vector<1x32x16xf32>
    %58 = vector.shape_cast %57 : vector<1x32x16xf32> to vector<32x16xf32>
    %cst_35 = arith.constant dense<0.000000e+00> : vector<2x16xf32>
    %59 = tpu.matmul %56, %58, %cst_35 {dimension_numbers = #tpu.dot_dimension_numbers<[1], [0], [0], [1], [0, 0, 1, 1], [], []>} : vector<2x32xf32>, vector<32x16xf32>, vector<2x16xf32> -> vector<2x16xf32>
    %c5_36 = arith.constant 5 : index
    %c0_37 = arith.constant 0 : index
    %60 = vector.load %arg5[%c5_36, %c0_37] : memref<8x16xf32, #tpu.memory_space<vmem>>, vector<1x16xf32>
    %61 = vector.shape_cast %60 : vector<1x16xf32> to vector<16xf32>
    %62 = vector.shape_cast %61 : vector<16xf32> to vector<1x16xf32>
    %63 = vector.broadcast %62 : vector<1x16xf32> to vector<2x16xf32>
    %64 = arith.addf %59, %63 : vector<2x16xf32>
    %65 = vector.extract_strided_slice %10 {offsets = [0, 192], sizes = [2, 32], strides = [1, 1]} : vector<2x256xf32> to vector<2x32xf32>
    %c6 = arith.constant 6 : index
    %c0_38 = arith.constant 0 : index
    %c0_39 = arith.constant 0 : index
    %66 = vector.load %arg4[%c6, %c0_38, %c0_39] : memref<8x32x16xf32, #tpu.memory_space<vmem>>, vector<1x32x16xf32>
    %67 = vector.shape_cast %66 : vector<1x32x16xf32> to vector<32x16xf32>
    %cst_40 = arith.constant dense<0.000000e+00> : vector<2x16xf32>
    %68 = tpu.matmul %65, %67, %cst_40 {dimension_numbers = #tpu.dot_dimension_numbers<[1], [0], [0], [1], [0, 0, 1, 1], [], []>} : vector<2x32xf32>, vector<32x16xf32>, vector<2x16xf32> -> vector<2x16xf32>
    %c6_41 = arith.constant 6 : index
    %c0_42 = arith.constant 0 : index
    %69 = vector.load %arg5[%c6_41, %c0_42] : memref<8x16xf32, #tpu.memory_space<vmem>>, vector<1x16xf32>
    %70 = vector.shape_cast %69 : vector<1x16xf32> to vector<16xf32>
    %71 = vector.shape_cast %70 : vector<16xf32> to vector<1x16xf32>
    %72 = vector.broadcast %71 : vector<1x16xf32> to vector<2x16xf32>
    %73 = arith.addf %68, %72 : vector<2x16xf32>
    %74 = vector.extract_strided_slice %10 {offsets = [0, 224], sizes = [2, 32], strides = [1, 1]} : vector<2x256xf32> to vector<2x32xf32>
    %c7 = arith.constant 7 : index
    %c0_43 = arith.constant 0 : index
    %c0_44 = arith.constant 0 : index
    %75 = vector.load %arg4[%c7, %c0_43, %c0_44] : memref<8x32x16xf32, #tpu.memory_space<vmem>>, vector<1x32x16xf32>
    %76 = vector.shape_cast %75 : vector<1x32x16xf32> to vector<32x16xf32>
    %cst_45 = arith.constant dense<0.000000e+00> : vector<2x16xf32>
    %77 = tpu.matmul %74, %76, %cst_45 {dimension_numbers = #tpu.dot_dimension_numbers<[1], [0], [0], [1], [0, 0, 1, 1], [], []>} : vector<2x32xf32>, vector<32x16xf32>, vector<2x16xf32> -> vector<2x16xf32>
    %c7_46 = arith.constant 7 : index
    %c0_47 = arith.constant 0 : index
    %78 = vector.load %arg5[%c7_46, %c0_47] : memref<8x16xf32, #tpu.memory_space<vmem>>, vector<1x16xf32>
    %79 = vector.shape_cast %78 : vector<1x16xf32> to vector<16xf32>
    %80 = vector.shape_cast %79 : vector<16xf32> to vector<1x16xf32>
    %81 = vector.broadcast %80 : vector<1x16xf32> to vector<2x16xf32>
    %82 = arith.addf %77, %81 : vector<2x16xf32>
    %83 = tpu.concatenate %19, %28, %37, %46, %55, %64, %73, %82 in 1 : vector<2x16xf32>, vector<2x16xf32>, vector<2x16xf32>, vector<2x16xf32>, vector<2x16xf32>, vector<2x16xf32>, vector<2x16xf32>, vector<2x16xf32> -> vector<2x128xf32>
    %c0_48 = arith.constant 0 : index
    %c0_49 = arith.constant 0 : index
    %84 = vector.load %arg6[%c0_48, %c0_49] : memref<2x128xf32, #tpu.memory_space<vmem>>, vector<2x128xf32>
    tpu.vector_store %arg6[%c0_48, %c0_49], %83 {strides = array<i32>} : memref<2x128xf32, #tpu.memory_space<vmem>>, vector<2x128xf32>,
    return
  }
  func.func @transform_0(%arg0: i32) -> (i32, i32) {
    %c0_i32 = arith.constant 0 : i32
    %c0_i32_0 = arith.constant 0 : i32
    %c0_i32_1 = arith.constant 0 : i32
    return %c0_i32, %c0_i32_0 : i32, i32
  }
  func.func @transform_1(%arg0: i32) -> (i32, i32) {
    %c0_i32 = arith.constant 0 : i32
    %c0_i32_0 = arith.constant 0 : i32
    return %c0_i32, %arg0 : i32, i32
  }
  func.func @transform_2(%arg0: i32) -> (i32, i32) {
    %c0_i32 = arith.constant 0 : i32
    %c0_i32_0 = arith.constant 0 : i32
    return %c0_i32, %arg0 : i32, i32
  }
  func.func @transform_3(%arg0: i32) -> (i32, i32, i32) {
    %c0_i32 = arith.constant 0 : i32
    %c0_i32_0 = arith.constant 0 : i32
    %c0_i32_1 = arith.constant 0 : i32
    return %arg0, %c0_i32, %c0_i32_0 : i32, i32, i32
  }
  func.func @transform_4(%arg0: i32) -> (i32, i32) {
    %c0_i32 = arith.constant 0 : i32
    %c0_i32_0 = arith.constant 0 : i32
    return %arg0, %c0_i32 : i32, i32
  }
  func.func @transform_5(%arg0: i32) -> (i32, i32) {
    %c0_i32 = arith.constant 0 : i32
    %c0_i32_0 = arith.constant 0 : i32
    return %c0_i32, %arg0 : i32, i32
  }
}

</mosaic_0001>

<llo_original>
// kernel: tpu_custom_call.1
$region0: #{tpu_custom_call.1}
  #allocation0 [shape = 'u32[]', space=smem, size = 0x4, offset = 0x4, fixed_abs, tag = 'smem constant byte address 0x4 - core index']
  #allocation1 [shape = 'u32[144,128]{1,0:T(1,128)}', space=vmem, size = 0x12000, scoped, tag = 'internal scratch']
  %s0 = inlined_call_operand.vmem [shape: f32[2,32], index: 0, kind: input, shape index: {}]
  %s1 = inlined_call_operand.vmem [shape: f32[32,512], index: 1, kind: input, shape index: {}]
  %s2 = inlined_call_operand.vmem [shape: f32[1,512], index: 2, kind: input, shape index: {}]
  %s3 = inlined_call_operand.vmem [shape: f32[16,32,16], index: 3, kind: input, shape index: {}]
  %s4 = inlined_call_operand.vmem [shape: f32[16,16], index: 4, kind: input, shape index: {}]
  %s5 = inlined_call_operand.hbm [shape: f32[2,256], index: 5, kind: output, shape index: {}]
  %s6 = sld [smem:[#allocation0]]
  $region76: #{tpu_custom_call.1} parent=0
    _
  %s8 = ssub.s32 1, %s6
  %s9 = scalar_select 0, %s8, %s6
  $region1: #{tpu_custom_call.1} parent=0
    #allocation2 [shape = 'u8[65536]{0}', space=vmem, size = 0x10000, scoped, tag = 'input window, operand 1']
    #allocation3 [shape = 'u8[2048]{0}', space=vmem, size = 0x800, scoped, tag = 'output window, operand 0']
    #allocation4 [shape = 's32[2]{0}', space=sflag, size = 0x8, scoped, tag = 'scoped memory for tpu_custom_call.1']
    %10 = vsyncpa [#allocation4], 0
    %s11 = scalar_lea.sflag [#allocation4], 1
    %12 = vsyncpa %s11, 0
    loop: start=0, step=1, limit=4
    $region2: #{tpu_custom_call.1} parent=1 // loop_pre_header
      _
    $region3: #{tpu_custom_call.1} parent=1 // loop_header
      %s14 = sphi 0, %s18
      %p15 = scmp.ge.s32.totalorder %s14, 4
      %s22 = sphi 0, %s22
      %s24 = sphi 0, %s22
      %s25 = sphi 0, %s24
      %s39 = sphi 0, %s25
      %s45 = sphi 0, %s47
      %s48 = sphi 0, %s45
      %s49 = sphi 0, %s48
      %s65 = sphi 0, %s49
      %s71 = sphi 0, %s73
      %s74 = sphi 0, %s71
      %s75 = sphi 0, %s74
      %s91 = sphi 0, %s75
      %s97 = sphi 0, %s99
      %s100 = sphi 0, %s97
      %s101 = sphi 0, %s100
      %s117 = sphi 0, %s101
      %s123 = sphi 0, %s125
      %s126 = sphi 0, %s123
      %s127 = sphi 0, %s126
      %s143 = sphi 0, %s127
      %s149 = sphi 0, %s151
      %s152 = sphi 0, %s149
      %s153 = sphi 0, %s152
      %s169 = sphi 0, %s153
    $region4: #{tpu_custom_call.1} parent=1 // loop_header_branch
      %17 = sbr.rel (%p15) target = $region8
    $region5: #{tpu_custom_call.1} parent=1 // loop_body
      %s19 = ssub.s32 %s14, 1
      %s20 = ssub.s32 %s14, 2
      %s21 = sadd.s32 %s14, 1
      %s23 = sadd.s32 %s22, 1
      %p26 = scmp.eq.s32.totalorder %s14, 1
      %p27 = scmp.ne.s32.totalorder %s22, %s24
      %p28 = scmp.eq.s32.totalorder %s14, 0
      %p29 = por %p27, %p28
      %p30 = scmp.ne.s32.totalorder %s22, %s24
      %p31 = scmp.eq.s32.totalorder %s19, 1
      %p32 = por %p30, %p31
      %p33 = scmp.ne.s32.totalorder %s24, %s25
      %p34 = scmp.eq.s32.totalorder %s19, 0
      %p35 = por %p33, %p34
      %p36 = scmp.ne.s32.totalorder %s24, %s25
      %p37 = scmp.eq.s32.totalorder %s20, 1
      %p38 = por %p36, %p37
      %p40 = scmp.ne.s32.totalorder %s25, %s39
      %p41 = scmp.eq.s32.totalorder %s20, 0
      %p42 = por %p40, %p41
      %s43 = ssub.s32 %s14, %s21
      %p44 = scmp.eq.s32.totalorder %s43, 0
      %s46 = sadd.s32 %s45, 1
      %s47 = scalar_select %p44, %s45, %s46
      %p50 = pneg %p44
      %p51 = scmp.eq.s32.totalorder %s14, 1
      %p52 = por %p50, %p51
      %p53 = scmp.ne.s32.totalorder %s45, %s48
      %p54 = scmp.eq.s32.totalorder %s14, 0
      %p55 = por %p53, %p54
      %p56 = scmp.ne.s32.totalorder %s45, %s48
      %p57 = scmp.eq.s32.totalorder %s19, 1
      %p58 = por %p56, %p57
      %p59 = scmp.ne.s32.totalorder %s48, %s49
      %p60 = scmp.eq.s32.totalorder %s19, 0
      %p61 = por %p59, %p60
      %p62 = scmp.ne.s32.totalorder %s48, %s49
      %p63 = scmp.eq.s32.totalorder %s20, 1
      %p64 = por %p62, %p63
      %p66 = scmp.ne.s32.totalorder %s49, %s65
      %p67 = scmp.eq.s32.totalorder %s20, 0
      %p68 = por %p66, %p67
      %s69 = ssub.s32 %s14, %s21
      %p70 = scmp.eq.s32.totalorder %s69, 0
      %s72 = sadd.s32 %s71, 1
      %s73 = scalar_select %p70, %s71, %s72
      %p76 = pneg %p70
      %p77 = scmp.eq.s32.totalorder %s14, 1
      %p78 = por %p76, %p77
      %p79 = scmp.ne.s32.totalorder %s71, %s74
      %p80 = scmp.eq.s32.totalorder %s14, 0
      %p81 = por %p79, %p80
      %p82 = scmp.ne.s32.totalorder %s71, %s74
      %p83 = scmp.eq.s32.totalorder %s19, 1
      %p84 = por %p82, %p83
      %p85 = scmp.ne.s32.totalorder %s74, %s75
      %p86 = scmp.eq.s32.totalorder %s19, 0
      %p87 = por %p85, %p86
      %p88 = scmp.ne.s32.totalorder %s74, %s75
      %p89 = scmp.eq.s32.totalorder %s20, 1
      %p90 = por %p88, %p89
      %p92 = scmp.ne.s32.totalorder %s75, %s91
      %p93 = scmp.eq.s32.totalorder %s20, 0
      %p94 = por %p92, %p93
      %s95 = ssub.s32 %s14, %s21
      %p96 = scmp.eq.s32.totalorder %s95, 0
      %s98 = sadd.s32 %s97, 1
      %s99 = scalar_select %p96, %s97, %s98
      %p102 = pneg %p96
      %p103 = scmp.eq.s32.totalorder %s14, 1
      %p104 = por %p102, %p103
      %p105 = scmp.ne.s32.totalorder %s97, %s100
      %p106 = scmp.eq.s32.totalorder %s14, 0
      %p107 = por %p105, %p106
      %p108 = scmp.ne.s32.totalorder %s97, %s100
      %p109 = scmp.eq.s32.totalorder %s19, 1
      %p110 = por %p108, %p109
      %p111 = scmp.ne.s32.totalorder %s100, %s101
      %p112 = scmp.eq.s32.totalorder %s19, 0
      %p113 = por %p111, %p112
      %p114 = scmp.ne.s32.totalorder %s100, %s101
      %p115 = scmp.eq.s32.totalorder %s20, 1
      %p116 = por %p114, %p115
      %p118 = scmp.ne.s32.totalorder %s101, %s117
      %p119 = scmp.eq.s32.totalorder %s20, 0
      %p120 = por %p118, %p119
      %s121 = ssub.s32 %s14, %s21
      %p122 = scmp.eq.s32.totalorder %s121, 0
      %s124 = sadd.s32 %s123, 1
      %s125 = scalar_select %p122, %s123, %s124
      %p128 = pneg %p122
      %p129 = scmp.eq.s32.totalorder %s14, 1
      %p130 = por %p128, %p129
      %p131 = scmp.ne.s32.totalorder %s123, %s126
      %p132 = scmp.eq.s32.totalorder %s14, 0
      %p133 = por %p131, %p132
      %p134 = scmp.ne.s32.totalorder %s123, %s126
      %p135 = scmp.eq.s32.totalorder %s19, 1
      %p136 = por %p134, %p135
      %p137 = scmp.ne.s32.totalorder %s126, %s127
      %p138 = scmp.eq.s32.totalorder %s19, 0
      %p139 = por %p137, %p138
      %p140 = scmp.ne.s32.totalorder %s126, %s127
      %p141 = scmp.eq.s32.totalorder %s20, 1
      %p142 = por %p140, %p141
      %p144 = scmp.ne.s32.totalorder %s127, %s143
      %p145 = scmp.eq.s32.totalorder %s20, 0
      %p146 = por %p144, %p145
      %s147 = ssub.s32 %s14, %s21
      %p148 = scmp.eq.s32.totalorder %s147, 0
      %s150 = sadd.s32 %s149, 1
      %s151 = scalar_select %p148, %s149, %s150
      %p154 = pneg %p148
      %p155 = scmp.eq.s32.totalorder %s14, 1
      %p156 = por %p154, %p155
      %p157 = scmp.ne.s32.totalorder %s149, %s152
      %p158 = scmp.eq.s32.totalorder %s14, 0
      %p159 = por %p157, %p158
      %p160 = scmp.ne.s32.totalorder %s149, %s152
      %p161 = scmp.eq.s32.totalorder %s19, 1
      %p162 = por %p160, %p161
      %p163 = scmp.ne.s32.totalorder %s152, %s153
      %p164 = scmp.eq.s32.totalorder %s19, 0
      %p165 = por %p163, %p164
      %p166 = scmp.ne.s32.totalorder %s152, %s153
      %p167 = scmp.eq.s32.totalorder %s20, 1
      %p168 = por %p166, %p167
      %p170 = scmp.ne.s32.totalorder %s153, %s169
      %p171 = scmp.eq.s32.totalorder %s20, 0
      %p172 = por %p170, %p171
      %p173 = scmp.le.s32.totalorder 1, %s14
      %p174 = scmp.lt.s32.totalorder %s14, 3
      %p175 = pnand %p173, %p174
      %p176 = pneg %p175
      // Predicated region
      $region9: #{tpu_custom_call.1} parent=5 // pred_check
        _
      $region10: #{tpu_custom_call.1} parent=5 // pred_check_branch
        %178 = sbr.rel (%p175) target = $region12
      $region11: #{tpu_custom_call.1} parent=5 // pred_region
        %s179 = ssub.s32 %s14, 1
        // Predicated region
        $region13: #{tpu_custom_call.1} parent=11 // pred_check
          %p180 = pneg %p35
        $region14: #{tpu_custom_call.1} parent=11 // pred_check_branch
          %182 = sbr.rel (%p180) target = $region16
        $region15: #{tpu_custom_call.1} parent=11 // pred_region
          _
        $region16: #{tpu_custom_call.1} parent=11 // pred_fallthru
          _
      $region12: #{tpu_custom_call.1} parent=5 // pred_fallthru
        _
      %p183 = scmp.lt.s32.totalorder %s14, 2
      // Predicated region
      $region17: #{tpu_custom_call.1} parent=5 // pred_check
        %p184 = pneg %p183
      $region18: #{tpu_custom_call.1} parent=5 // pred_check_branch
        %186 = sbr.rel (%p184) target = $region20
      $region19: #{tpu_custom_call.1} parent=5 // pred_region
        // Predicated region
        $region21: #{tpu_custom_call.1} parent=19 // pred_check
          %p187 = pneg %p55
        $region22: #{tpu_custom_call.1} parent=19 // pred_check_branch
          %189 = sbr.rel (%p187) target = $region24
        $region23: #{tpu_custom_call.1} parent=19 // pred_region
          %s190 = sand.u32 %s45, 1
          %s191 = sand.u32 %s45, 1
          %s192 = smul.addr %s191, 64
          %s193 = scalar_lea.vmem [#allocation2], %s192
          %s194 = smul.u32 2, %s14
          %s195 = smul.addr %s194, 8
          %s196 = scalar_lea.vmem %s1, %s195
          // Predicated region
          $region25: #{tpu_custom_call.1} parent=23 // pred_check
            _
          $region26: #{tpu_custom_call.1} parent=23 // pred_check_branch
            %198 = sbr.rel (0) target = $region28
          $region27: #{tpu_custom_call.1} parent=23 // pred_region
            // Predicated region
            $region29: #{tpu_custom_call.1} parent=27 // pred_check
              _
            $region30: #{tpu_custom_call.1} parent=27 // pred_check_branch
              %200 = sbr.rel (0) target = $region32
            $region31: #{tpu_custom_call.1} parent=27 // pred_region
              loop: start=0, step=1, limit=1
              $region33: #{tpu_custom_call.1} parent=31 // loop_pre_header
                _
              $region34: #{tpu_custom_call.1} parent=31 // loop_header
                %s202 = sphi 0, %s206
                %p203 = scmp.ge.s32.totalorder %s202, 1
                %s207 = sphi %s196, %s196
                %s208 = sphi %s193, %s193
              $region35: #{tpu_custom_call.1} parent=31 // loop_header_branch
                %205 = sbr.rel (%p203) target = $region39
              $region36: #{tpu_custom_call.1} parent=31 // loop_body
                %v209 = vld [vmem:[%s207] sm:$0xff]
                %210 = vst [vmem:[%s208] sm:$0xff] %v209
                %v211 = vld [vmem:[%s207 + $0x8] sm:$0xff]
                %212 = vst [vmem:[%s208 + $0x8] sm:$0xff] %v211
                %v213 = vld [vmem:[%s207 + $0x20] sm:$0xff]
                %214 = vst [vmem:[%s208 + $0x10] sm:$0xff] %v213
                %v215 = vld [vmem:[%s207 + $0x28] sm:$0xff]
                %216 = vst [vmem:[%s208 + $0x18] sm:$0xff] %v215
                %v217 = vld [vmem:[%s207 + $0x40] sm:$0xff]
                %218 = vst [vmem:[%s208 + $0x20] sm:$0xff] %v217
                %v219 = vld [vmem:[%s207 + $0x48] sm:$0xff]
                %220 = vst [vmem:[%s208 + $0x28] sm:$0xff] %v219
                %v221 = vld [vmem:[%s207 + $0x60] sm:$0xff]
                %222 = vst [vmem:[%s208 + $0x30] sm:$0xff] %v221
                %v223 = vld [vmem:[%s207 + $0x68] sm:$0xff]
                %224 = vst [vmem:[%s208 + $0x38] sm:$0xff] %v223
              $region37: #{tpu_custom_call.1} parent=31 // loop_footer
                %s206 = sadd.s32 1, %s202
              $region38: #{tpu_custom_call.1} parent=31 // loop_footer_branch
                %201 = sbr.rel target = $region34
              $region39: #{tpu_custom_call.1} parent=31 // loop_exit
                _
            $region32: #{tpu_custom_call.1} parent=27 // pred_fallthru
              _
            // Predicated region
            $region40: #{tpu_custom_call.1} parent=27 // pred_check
              _
            $region41: #{tpu_custom_call.1} parent=27 // pred_check_branch
              %226 = sbr.rel target = $region43
            $region42: #{tpu_custom_call.1} parent=27 // pred_region
              _
            $region43: #{tpu_custom_call.1} parent=27 // pred_fallthru
              _
          $region28: #{tpu_custom_call.1} parent=23 // pred_fallthru
            _
          %227 = vnop
        $region24: #{tpu_custom_call.1} parent=19 // pred_fallthru
          _
        // Predicated region
        $region44: #{tpu_custom_call.1} parent=19 // pred_check
          %p228 = pneg %p81
        $region45: #{tpu_custom_call.1} parent=19 // pred_check_branch
          %230 = sbr.rel (%p228) target = $region47
        $region46: #{tpu_custom_call.1} parent=19 // pred_region
          %s231 = smul.u32 2, %s14
          %p232 = scmp.lt.s32.totalorder %s231, 3
          %s233 = scalar_select %p232, %s231, 3
          %s234 = scalar_lea.vmem %s2, %s233
          %s235 = smul.u32 2, %s14
        $region47: #{tpu_custom_call.1} parent=19 // pred_fallthru
          _
        // Predicated region
        $region48: #{tpu_custom_call.1} parent=19 // pred_check
          %p236 = pneg %p107
        $region49: #{tpu_custom_call.1} parent=19 // pred_check_branch
          %238 = sbr.rel (%p236) target = $region51
        $region50: #{tpu_custom_call.1} parent=19 // pred_region
          %s239 = smul.u32 8, %s14
          %p240 = scmp.lt.s32.totalorder %s239, 15
          %s241 = scalar_select %p240, %s239, 15
          %s242 = smul.addr %s241, 4
          %s243 = smul.addr %s242, 8
          %s244 = scalar_lea.vmem %s3, %s243
          %s245 = smul.u32 8, %s14
        $region51: #{tpu_custom_call.1} parent=19 // pred_fallthru
          _
        // Predicated region
        $region52: #{tpu_custom_call.1} parent=19 // pred_check
          %p246 = pneg %p133
        $region53: #{tpu_custom_call.1} parent=19 // pred_check_branch
          %248 = sbr.rel (%p246) target = $region55
        $region54: #{tpu_custom_call.1} parent=19 // pred_region
          %p249 = scmp.lt.s32.totalorder %s14, 1
          %s250 = scalar_select %p249, %s14, 1
          %s251 = smul.addr %s250, 8
          %s252 = scalar_lea.vmem %s4, %s251
        $region55: #{tpu_custom_call.1} parent=19 // pred_fallthru
          _
      $region20: #{tpu_custom_call.1} parent=5 // pred_fallthru
        _
      %p253 = scmp.le.s32.totalorder 1, %s14
      %p254 = scmp.lt.s32.totalorder %s14, 3
      %p255 = pnand %p253, %p254
      %p256 = pneg %p255
      // Predicated region
      $region56: #{tpu_custom_call.1} parent=5 // pred_check
        _
      $region57: #{tpu_custom_call.1} parent=5 // pred_check_branch
        %258 = sbr.rel (%p255) target = $region59
      $region58: #{tpu_custom_call.1} parent=5 // pred_region
        %s259 = ssub.s32 %s14, 1
        %s260 = sand.u32 %s48, 1
        %s261 = sand.u32 %s48, 1
        %s262 = smul.addr %s261, 64
        %s263 = scalar_lea.vmem [#allocation2], %s262
        // Predicated region
        $region60: #{tpu_custom_call.1} parent=58 // pred_check
          %p264 = pneg %p61
        $region61: #{tpu_custom_call.1} parent=58 // pred_check_branch
          %266 = sbr.rel (%p264) target = $region63
        $region62: #{tpu_custom_call.1} parent=58 // pred_region
          _
        $region63: #{tpu_custom_call.1} parent=58 // pred_fallthru
          _
        %p267 = pneg %p35
        %p268 = pneg %p32
        %s269 = sand.u32 %s48, 1
        %s270 = sand.u32 %s48, 1
        %s271 = smul.addr %s270, 64
        %s272 = scalar_lea.vmem [#allocation2], %s271
        %p273 = pneg %p61
        %p274 = pneg %p58
        %s275 = smul.u32 2, %s19
        %p276 = scmp.lt.s32.totalorder %s275, 3
        %s277 = scalar_select %p276, %s275, 3
        %s278 = scalar_lea.vmem %s2, %s277
        %p279 = pneg %p87
        %p280 = pneg %p84
        %s281 = smul.u32 8, %s19
        %p282 = scmp.lt.s32.totalorder %s281, 15
        %s283 = scalar_select %p282, %s281, 15
        %s284 = smul.addr %s283, 4
        %s285 = smul.addr %s284, 8
        %s286 = scalar_lea.vmem %s3, %s285
        %p287 = pneg %p113
        %p288 = pneg %p110
        %p289 = scmp.lt.s32.totalorder %s19, 1
        %s290 = scalar_select %p289, %s19, 1
        %s291 = smul.addr %s290, 8
        %s292 = scalar_lea.vmem %s4, %s291
        %p293 = pneg %p139
        %p294 = pneg %p136
        %p295 = pneg %p165
        %p296 = pneg %p162
        %s297 = sand.u32 %s152, 1
        %s298 = scalar_lea.sflag [#allocation4], %s297
        %s299 = sand.u32 %s152, 1
        %s300 = smul.addr %s299, 2
        %s301 = scalar_lea.vmem [#allocation3], %s300
        %s302 = smul.u32 2, %s19
        %s303 = smul.u32 2, %s19
        %p304 = scmp.lt.s32.totalorder %s303, 3
        %s305 = scalar_select %p304, %s303, 3
        %s306 = scalar_lea.vmem %s2, %s305
        %s307 = smul.u32 2, %s19
        %s308 = smul.u32 8, %s19
        %p309 = scmp.lt.s32.totalorder %s308, 15
        %s310 = scalar_select %p309, %s308, 15
        %s311 = smul.addr %s310, 4
        %s312 = smul.addr %s311, 8
        %s313 = scalar_lea.vmem %s3, %s312
        %s314 = smul.u32 8, %s19
        %p315 = scmp.lt.s32.totalorder %s19, 1
        %s316 = scalar_select %p315, %s19, 1
        %s317 = smul.addr %s316, 8
        %s318 = scalar_lea.vmem %s4, %s317
        %v319 = vld [vmem:[%s0] sm:$0x3]
        %v320 = vld [vmem:[%s263] sm:$0xff]
        %v321 = vld [vmem:[%s263 + $0x8] sm:$0xff]
        %v322 = vld [vmem:[%s263 + $0x10] sm:$0xff]
        %v323 = vld [vmem:[%s263 + $0x18] sm:$0xff]
        %v324 = vld [vmem:[%s263 + $0x20] sm:$0xff]
        %v325 = vld [vmem:[%s263 + $0x28] sm:$0xff]
        %v326 = vld [vmem:[%s263 + $0x30] sm:$0xff]
        %v327 = vld [vmem:[%s263 + $0x38] sm:$0xff]
        %v328 = vld [vmem:[%s306] sm:$0x3]
        %v330 = vlaneseq
        %v331 = vshrl.u32 %v330, 7
        %v332 = vsub.s32 0, %v331
        %v333 = vrot.slane %v328, %v332
        %v334 = vlaneseq
        %v335 = vshrl.u32 %v334, 7
        %v336 = vsub.s32 1, %v335
        %v337 = vrot.slane %v328, %v336
        %vm340 = vcmask 261120
        %v342 = vsel %vm340, %v319, 0
        %344 = vmatprep.subr.mxu0 %v321
        %345 = vmatpush1.msra.mxu0 %v320
        %346 = vmatprep.subr.mxu0 %v323
        %347 = vmatpush1.msra.mxu0 %v322
        %348 = vmatprep.subr.mxu0 %v325
        %349 = vmatpush1.msra.mxu0 %v324
        %350 = vmatprep.subr.mxu0 %v327
        %351 = vmatpush1.msra.mxu0 %v326
        %352 = vmatprep.subr.mxu0 0.0
        %353 = vmatpush1.msra.mxu0 0.0
        %354 = vmatprep.subr.mxu0 0.0
        %355 = vmatpush1.msra.mxu0 0.0
        %356 = vmatprep.subr.mxu0 0.0
        %357 = vmatpush1.msra.mxu0 0.0
        %358 = vmatprep.subr.mxu0 0.0
        %359 = vmatpush1.msra.mxu0 0.0
        %360 = vmatprep.subr.mxu0 0.0
        %361 = vmatpush1.msra.mxu0 0.0
        %362 = vmatprep.subr.mxu0 0.0
        %363 = vmatpush1.msra.mxu0 0.0
        %364 = vmatprep.subr.mxu0 0.0
        %365 = vmatpush1.msra.mxu0 0.0
        %366 = vmatprep.subr.mxu0 0.0
        %367 = vmatpush1.msra.mxu0 0.0
        %368 = vmatprep.subr.mxu0 0.0
        %369 = vmatpush1.msra.mxu0 0.0
        %370 = vmatprep.subr.mxu0 0.0
        %371 = vmatpush1.msra.mxu0 0.0
        %372 = vmatprep.subr.mxu0 0.0
        %373 = vmatpush1.msra.mxu0 0.0
        %374 = vmatprep.subr.mxu0 0.0
        %375 = vmatpush1.msra.mxu0 0.0
        %376 = vmatprep.subr.mxu0 0.0
        %377 = vmatpush1.msra.mxu0 0.0
        %378 = vmatprep.subr.mxu0 0.0
        %379 = vmatpush1.msra.mxu0 0.0
        %380 = vmatprep.subr.mxu0 0.0
        %381 = vmatpush1.msra.mxu0 0.0
        %382 = vmatprep.subr.mxu0 0.0
        %383 = vmatpush1.msra.mxu0 0.0
        %384 = vmatprep.subr.mxu0 0.0
        %385 = vmatpush1.msra.mxu0 0.0
        %386 = vmatprep.subr.mxu0 0.0
        %387 = vmatpush1.msra.mxu0 0.0
        %388 = vmatprep.subr.mxu0 0.0
        %389 = vmatpush1.msra.mxu0 0.0
        %390 = vmatprep.subr.mxu0 0.0
        %391 = vmatpush1.msra.mxu0 0.0
        %392 = vmatprep.subr.mxu0 0.0
        %393 = vmatpush1.msra.mxu0 0.0
        %394 = vmatprep.subr.mxu0 0.0
        %395 = vmatpush1.msra.mxu0 0.0
        %396 = vmatprep.subr.mxu0 0.0
        %397 = vmatpush1.msra.mxu0 0.0
        %398 = vmatprep.subr.mxu0 0.0
        %399 = vmatpush1.msra.mxu0 0.0
        %400 = vmatprep.subr.mxu0 0.0
        %401 = vmatpush1.msra.mxu0 0.0
        %402 = vmatprep.subr.mxu0 0.0
        %403 = vmatpush1.msra.mxu0 0.0
        %404 = vmatprep.subr.mxu0 0.0
        %405 = vmatpush1.msra.mxu0 0.0
        %406 = vmatprep.subr.mxu0 0.0
        %407 = vmatpush1.msra.mxu0 0.0
        %408 = vmatprep.mubr.f32.mxu0 0.0
        %409 = vmatmul.mubr.f32.gmra.mrb[0].mxu0 %v342
        %v410 = vpop.f32.mrb[0].mxu0
        %v411 = vadd.f32 %v333, %v410
        %v412 = vpop.f32.mrb[0].mxu0
        %v413 = vadd.f32 %v337, %v412
        %414 = vdwg.mxu0
        %vm415 = vcmp.ge.f32.partialorder %v411, 0.0
        %vm416 = vcmp.ge.f32.partialorder %v413, 0.0
        %v417 = vmul.f32 %v411, 0.01
        %v418 = vmul.f32 %v413, 0.01
        %v419 = vsel %vm415, %v411, %v417
        %v420 = vsel %vm416, %v413, %v418
        %v421 = vld [vmem:[%s313] sm:$0xff]
        %v422 = vld [vmem:[%s313 + $0x8] sm:$0xff]
        %v423 = vld [vmem:[%s313 + $0x10] sm:$0xff]
        %v424 = vld [vmem:[%s313 + $0x18] sm:$0xff]
        %v425 = vld [vmem:[%s318] sm:$0x1]
        %v426 = vlaneseq
        %v427 = vshrl.u32 %v426, 7
        %v428 = vsub.s32 0, %v427
        %v429 = vrot.slane %v425, %v428
        %v431 = vsel %vm340, %v419, 0
        %433 = vmatprep.subr.mxu0 0.0
        %434 = vmatpush1.msra.mxu0 %v421
        %435 = vmatprep.subr.mxu0 0.0
        %436 = vmatpush1.msra.mxu0 %v422
        %437 = vmatprep.subr.mxu0 0.0
        %438 = vmatpush1.msra.mxu0 %v423
        %439 = vmatprep.subr.mxu0 0.0
        %440 = vmatpush1.msra.mxu0 %v424
        %441 = vmatprep.subr.mxu0 0.0
        %442 = vmatpush1.msra.mxu0 0.0
        %443 = vmatprep.subr.mxu0 0.0
        %444 = vmatpush1.msra.mxu0 0.0
        %445 = vmatprep.subr.mxu0 0.0
        %446 = vmatpush1.msra.mxu0 0.0
        %447 = vmatprep.subr.mxu0 0.0
        %448 = vmatpush1.msra.mxu0 0.0
        %449 = vmatprep.subr.mxu0 0.0
        %450 = vmatpush1.msra.mxu0 0.0
        %451 = vmatprep.subr.mxu0 0.0
        %452 = vmatpush1.msra.mxu0 0.0
        %453 = vmatprep.subr.mxu0 0.0
        %454 = vmatpush1.msra.mxu0 0.0
        %455 = vmatprep.subr.mxu0 0.0
        %456 = vmatpush1.msra.mxu0 0.0
        %457 = vmatprep.subr.mxu0 0.0
        %458 = vmatpush1.msra.mxu0 0.0
        %459 = vmatprep.subr.mxu0 0.0
        %460 = vmatpush1.msra.mxu0 0.0
        %461 = vmatprep.subr.mxu0 0.0
        %462 = vmatpush1.msra.mxu0 0.0
        %463 = vmatprep.subr.mxu0 0.0
        %464 = vmatpush1.msra.mxu0 0.0
        %465 = vmatprep.subr.mxu0 0.0
        %466 = vmatpush1.msra.mxu0 0.0
        %467 = vmatprep.subr.mxu0 0.0
        %468 = vmatpush1.msra.mxu0 0.0
        %469 = vmatprep.subr.mxu0 0.0
        %470 = vmatpush1.msra.mxu0 0.0
        %471 = vmatprep.subr.mxu0 0.0
        %472 = vmatpush1.msra.mxu0 0.0
        %473 = vmatprep.subr.mxu0 0.0
        %474 = vmatpush1.msra.mxu0 0.0
        %475 = vmatprep.subr.mxu0 0.0
        %476 = vmatpush1.msra.mxu0 0.0
        %477 = vmatprep.subr.mxu0 0.0
        %478 = vmatpush1.msra.mxu0 0.0
        %479 = vmatprep.subr.mxu0 0.0
        %480 = vmatpush1.msra.mxu0 0.0
        %481 = vmatprep.subr.mxu0 0.0
        %482 = vmatpush1.msra.mxu0 0.0
        %483 = vmatprep.subr.mxu0 0.0
        %484 = vmatpush1.msra.mxu0 0.0
        %485 = vmatprep.subr.mxu0 0.0
        %486 = vmatpush1.msra.mxu0 0.0
        %487 = vmatprep.subr.mxu0 0.0
        %488 = vmatpush1.msra.mxu0 0.0
        %489 = vmatprep.subr.mxu0 0.0
        %490 = vmatpush1.msra.mxu0 0.0
        %491 = vmatprep.subr.mxu0 0.0
        %492 = vmatpush1.msra.mxu0 0.0
        %493 = vmatprep.subr.mxu0 0.0
        %494 = vmatpush1.msra.mxu0 0.0
        %495 = vmatprep.subr.mxu0 0.0
        %496 = vmatpush1.msra.mxu0 0.0
        %497 = vmatprep.mubr.f32.mxu0 0.0
        %498 = vmatmul.mubr.f32.gmra.mrb[0].mxu0 %v431
        %v499 = vpop.f32.mrb[0].mxu0
        %v500 = vadd.f32 %v429, %v499
        %v501 = vpop.f32.mrb[0].mxu0
        %502 = vdwg.mxu0
        %s503 = scalar_lea.vmem %s313, 32
        %v504 = vld [vmem:[%s503] sm:$0xff]
        %v505 = vld [vmem:[%s503 + $0x8] sm:$0xff]
        %v506 = vld [vmem:[%s503 + $0x10] sm:$0xff]
        %v507 = vld [vmem:[%s503 + $0x18] sm:$0xff]
        %v508 = vld [vmem:[%s318 + $0x1] sm:$0x1]
        %v509 = vlaneseq
        %v510 = vshrl.u32 %v509, 7
        %v511 = vsub.s32 0, %v510
        %v512 = vrot.slane %v508, %v511
        %513 = vrot.lane.b32.xlu0 %v419, 96
        %v514 = vpop.permute.xlu0 %513
        %v515 = vsel %vm340, %v514, 0
        %517 = vmatprep.subr.mxu0 0.0
        %518 = vmatpush1.msra.mxu0 %v504
        %519 = vmatprep.subr.mxu0 0.0
        %520 = vmatpush1.msra.mxu0 %v505
        %521 = vmatprep.subr.mxu0 0.0
        %522 = vmatpush1.msra.mxu0 %v506
        %523 = vmatprep.subr.mxu0 0.0
        %524 = vmatpush1.msra.mxu0 %v507
        %525 = vmatprep.subr.mxu0 0.0
        %526 = vmatpush1.msra.mxu0 0.0
        %527 = vmatprep.subr.mxu0 0.0
        %528 = vmatpush1.msra.mxu0 0.0
        %529 = vmatprep.subr.mxu0 0.0
        %530 = vmatpush1.msra.mxu0 0.0
        %531 = vmatprep.subr.mxu0 0.0
        %532 = vmatpush1.msra.mxu0 0.0
        %533 = vmatprep.subr.mxu0 0.0
        %534 = vmatpush1.msra.mxu0 0.0
        %535 = vmatprep.subr.mxu0 0.0
        %536 = vmatpush1.msra.mxu0 0.0
        %537 = vmatprep.subr.mxu0 0.0
        %538 = vmatpush1.msra.mxu0 0.0
        %539 = vmatprep.subr.mxu0 0.0
        %540 = vmatpush1.msra.mxu0 0.0
        %541 = vmatprep.subr.mxu0 0.0
        %542 = vmatpush1.msra.mxu0 0.0
        %543 = vmatprep.subr.mxu0 0.0
        %544 = vmatpush1.msra.mxu0 0.0
        %545 = vmatprep.subr.mxu0 0.0
        %546 = vmatpush1.msra.mxu0 0.0
        %547 = vmatprep.subr.mxu0 0.0
        %548 = vmatpush1.msra.mxu0 0.0
        %549 = vmatprep.subr.mxu0 0.0
        %550 = vmatpush1.msra.mxu0 0.0
        %551 = vmatprep.subr.mxu0 0.0
        %552 = vmatpush1.msra.mxu0 0.0
        %553 = vmatprep.subr.mxu0 0.0
        %554 = vmatpush1.msra.mxu0 0.0
        %555 = vmatprep.subr.mxu0 0.0
        %556 = vmatpush1.msra.mxu0 0.0
        %557 = vmatprep.subr.mxu0 0.0
        %558 = vmatpush1.msra.mxu0 0.0
        %559 = vmatprep.subr.mxu0 0.0
        %560 = vmatpush1.msra.mxu0 0.0
        %561 = vmatprep.subr.mxu0 0.0
        %562 = vmatpush1.msra.mxu0 0.0
        %563 = vmatprep.subr.mxu0 0.0
        %564 = vmatpush1.msra.mxu0 0.0
        %565 = vmatprep.subr.mxu0 0.0
        %566 = vmatpush1.msra.mxu0 0.0
        %567 = vmatprep.subr.mxu0 0.0
        %568 = vmatpush1.msra.mxu0 0.0
        %569 = vmatprep.subr.mxu0 0.0
        %570 = vmatpush1.msra.mxu0 0.0
        %571 = vmatprep.subr.mxu0 0.0
        %572 = vmatpush1.msra.mxu0 0.0
        %573 = vmatprep.subr.mxu0 0.0
        %574 = vmatpush1.msra.mxu0 0.0
        %575 = vmatprep.subr.mxu0 0.0
        %576 = vmatpush1.msra.mxu0 0.0
        %577 = vmatprep.subr.mxu0 0.0
        %578 = vmatpush1.msra.mxu0 0.0
        %579 = vmatprep.subr.mxu0 0.0
        %580 = vmatpush1.msra.mxu0 0.0
        %581 = vmatprep.mubr.f32.mxu0 0.0
        %582 = vmatmul.mubr.f32.gmra.mrb[0].mxu0 %v515
        %v583 = vpop.f32.mrb[0].mxu0
        %v584 = vadd.f32 %v512, %v583
        %v585 = vpop.f32.mrb[0].mxu0
        %586 = vdwg.mxu0
        %s587 = scalar_lea.vmem %s313, 64
        %v588 = vld [vmem:[%s587] sm:$0xff]
        %v589 = vld [vmem:[%s587 + $0x8] sm:$0xff]
        %v590 = vld [vmem:[%s587 + $0x10] sm:$0xff]
        %v591 = vld [vmem:[%s587 + $0x18] sm:$0xff]
        %v592 = vld [vmem:[%s318 + $0x2] sm:$0x1]
        %v593 = vlaneseq
        %v594 = vshrl.u32 %v593, 7
        %v595 = vsub.s32 0, %v594
        %v596 = vrot.slane %v592, %v595
        %597 = vrot.lane.b32.xlu0 %v419, 64
        %v598 = vpop.permute.xlu0 %597
        %v599 = vsel %vm340, %v598, 0
        %601 = vmatprep.subr.mxu0 0.0
        %602 = vmatpush1.msra.mxu0 %v588
        %603 = vmatprep.subr.mxu0 0.0
        %604 = vmatpush1.msra.mxu0 %v589
        %605 = vmatprep.subr.mxu0 0.0
        %606 = vmatpush1.msra.mxu0 %v590
        %607 = vmatprep.subr.mxu0 0.0
        %608 = vmatpush1.msra.mxu0 %v591
        %609 = vmatprep.subr.mxu0 0.0
        %610 = vmatpush1.msra.mxu0 0.0
        %611 = vmatprep.subr.mxu0 0.0
        %612 = vmatpush1.msra.mxu0 0.0
        %613 = vmatprep.subr.mxu0 0.0
        %614 = vmatpush1.msra.mxu0 0.0
        %615 = vmatprep.subr.mxu0 0.0
        %616 = vmatpush1.msra.mxu0 0.0
        %617 = vmatprep.subr.mxu0 0.0
        %618 = vmatpush1.msra.mxu0 0.0
        %619 = vmatprep.subr.mxu0 0.0
        %620 = vmatpush1.msra.mxu0 0.0
        %621 = vmatprep.subr.mxu0 0.0
        %622 = vmatpush1.msra.mxu0 0.0
        %623 = vmatprep.subr.mxu0 0.0
        %624 = vmatpush1.msra.mxu0 0.0
        %625 = vmatprep.subr.mxu0 0.0
        %626 = vmatpush1.msra.mxu0 0.0
        %627 = vmatprep.subr.mxu0 0.0
        %628 = vmatpush1.msra.mxu0 0.0
        %629 = vmatprep.subr.mxu0 0.0
        %630 = vmatpush1.msra.mxu0 0.0
        %631 = vmatprep.subr.mxu0 0.0
        %632 = vmatpush1.msra.mxu0 0.0
        %633 = vmatprep.subr.mxu0 0.0
        %634 = vmatpush1.msra.mxu0 0.0
        %635 = vmatprep.subr.mxu0 0.0
        %636 = vmatpush1.msra.mxu0 0.0
        %637 = vmatprep.subr.mxu0 0.0
        %638 = vmatpush1.msra.mxu0 0.0
        %639 = vmatprep.subr.mxu0 0.0
        %640 = vmatpush1.msra.mxu0 0.0
        %641 = vmatprep.subr.mxu0 0.0
        %642 = vmatpush1.msra.mxu0 0.0
        %643 = vmatprep.subr.mxu0 0.0
        %644 = vmatpush1.msra.mxu0 0.0
        %645 = vmatprep.subr.mxu0 0.0
        %646 = vmatpush1.msra.mxu0 0.0
        %647 = vmatprep.subr.mxu0 0.0
        %648 = vmatpush1.msra.mxu0 0.0
        %649 = vmatprep.subr.mxu0 0.0
        %650 = vmatpush1.msra.mxu0 0.0
        %651 = vmatprep.subr.mxu0 0.0
        %652 = vmatpush1.msra.mxu0 0.0
        %653 = vmatprep.subr.mxu0 0.0
        %654 = vmatpush1.msra.mxu0 0.0
        %655 = vmatprep.subr.mxu0 0.0
        %656 = vmatpush1.msra.mxu0 0.0
        %657 = vmatprep.subr.mxu0 0.0
        %658 = vmatpush1.msra.mxu0 0.0
        %659 = vmatprep.subr.mxu0 0.0
        %660 = vmatpush1.msra.mxu0 0.0
        %661 = vmatprep.subr.mxu0 0.0
        %662 = vmatpush1.msra.mxu0 0.0
        %663 = vmatprep.subr.mxu0 0.0
        %664 = vmatpush1.msra.mxu0 0.0
        %665 = vmatprep.mubr.f32.mxu0 0.0
        %666 = vmatmul.mubr.f32.gmra.mrb[0].mxu0 %v599
        %v667 = vpop.f32.mrb[0].mxu0
        %v668 = vadd.f32 %v596, %v667
        %v669 = vpop.f32.mrb[0].mxu0
        %670 = vdwg.mxu0
        %s671 = scalar_lea.vmem %s313, 96
        %v672 = vld [vmem:[%s671] sm:$0xff]
        %v673 = vld [vmem:[%s671 + $0x8] sm:$0xff]
        %v674 = vld [vmem:[%s671 + $0x10] sm:$0xff]
        %v675 = vld [vmem:[%s671 + $0x18] sm:$0xff]
        %v676 = vld [vmem:[%s318 + $0x3] sm:$0x1]
        %v677 = vlaneseq
        %v678 = vshrl.u32 %v677, 7
        %v679 = vsub.s32 0, %v678
        %v680 = vrot.slane %v676, %v679
        %681 = vrot.lane.b32.xlu0 %v419, 32
        %v682 = vpop.permute.xlu0 %681
        %v683 = vsel %vm340, %v682, 0
        %685 = vmatprep.subr.mxu0 0.0
        %686 = vmatpush1.msra.mxu0 %v672
        %687 = vmatprep.subr.mxu0 0.0
        %688 = vmatpush1.msra.mxu0 %v673
        %689 = vmatprep.subr.mxu0 0.0
        %690 = vmatpush1.msra.mxu0 %v674
        %691 = vmatprep.subr.mxu0 0.0
        %692 = vmatpush1.msra.mxu0 %v675
        %693 = vmatprep.subr.mxu0 0.0
        %694 = vmatpush1.msra.mxu0 0.0
        %695 = vmatprep.subr.mxu0 0.0
        %696 = vmatpush1.msra.mxu0 0.0
        %697 = vmatprep.subr.mxu0 0.0
        %698 = vmatpush1.msra.mxu0 0.0
        %699 = vmatprep.subr.mxu0 0.0
        %700 = vmatpush1.msra.mxu0 0.0
        %701 = vmatprep.subr.mxu0 0.0
        %702 = vmatpush1.msra.mxu0 0.0
        %703 = vmatprep.subr.mxu0 0.0
        %704 = vmatpush1.msra.mxu0 0.0
        %705 = vmatprep.subr.mxu0 0.0
        %706 = vmatpush1.msra.mxu0 0.0
        %707 = vmatprep.subr.mxu0 0.0
        %708 = vmatpush1.msra.mxu0 0.0
        %709 = vmatprep.subr.mxu0 0.0
        %710 = vmatpush1.msra.mxu0 0.0
        %711 = vmatprep.subr.mxu0 0.0
        %712 = vmatpush1.msra.mxu0 0.0
        %713 = vmatprep.subr.mxu0 0.0
        %714 = vmatpush1.msra.mxu0 0.0
        %715 = vmatprep.subr.mxu0 0.0
        %716 = vmatpush1.msra.mxu0 0.0
        %717 = vmatprep.subr.mxu0 0.0
        %718 = vmatpush1.msra.mxu0 0.0
        %719 = vmatprep.subr.mxu0 0.0
        %720 = vmatpush1.msra.mxu0 0.0
        %721 = vmatprep.subr.mxu0 0.0
        %722 = vmatpush1.msra.mxu0 0.0
        %723 = vmatprep.subr.mxu0 0.0
        %724 = vmatpush1.msra.mxu0 0.0
        %725 = vmatprep.subr.mxu0 0.0
        %726 = vmatpush1.msra.mxu0 0.0
        %727 = vmatprep.subr.mxu0 0.0
        %728 = vmatpush1.msra.mxu0 0.0
        %729 = vmatprep.subr.mxu0 0.0
        %730 = vmatpush1.msra.mxu0 0.0
        %731 = vmatprep.subr.mxu0 0.0
        %732 = vmatpush1.msra.mxu0 0.0
        %733 = vmatprep.subr.mxu0 0.0
        %734 = vmatpush1.msra.mxu0 0.0
        %735 = vmatprep.subr.mxu0 0.0
        %736 = vmatpush1.msra.mxu0 0.0
        %737 = vmatprep.subr.mxu0 0.0
        %738 = vmatpush1.msra.mxu0 0.0
        %739 = vmatprep.subr.mxu0 0.0
        %740 = vmatpush1.msra.mxu0 0.0
        %741 = vmatprep.subr.mxu0 0.0
        %742 = vmatpush1.msra.mxu0 0.0
        %743 = vmatprep.subr.mxu0 0.0
        %744 = vmatpush1.msra.mxu0 0.0
        %745 = vmatprep.subr.mxu0 0.0
        %746 = vmatpush1.msra.mxu0 0.0
        %747 = vmatprep.subr.mxu0 0.0
        %748 = vmatpush1.msra.mxu0 0.0
        %749 = vmatprep.mubr.f32.mxu0 0.0
        %750 = vmatmul.mubr.f32.gmra.mrb[0].mxu0 %v683
        %v751 = vpop.f32.mrb[0].mxu0
        %v752 = vadd.f32 %v680, %v751
        %v753 = vpop.f32.mrb[0].mxu0
        %754 = vdwg.mxu0
        %s755 = scalar_lea.vmem %s313, 128
        %v756 = vld [vmem:[%s755] sm:$0xff]
        %v757 = vld [vmem:[%s755 + $0x8] sm:$0xff]
        %v758 = vld [vmem:[%s755 + $0x10] sm:$0xff]
        %v759 = vld [vmem:[%s755 + $0x18] sm:$0xff]
        %v760 = vld [vmem:[%s318 + $0x4] sm:$0x1]
        %v761 = vlaneseq
        %v762 = vshrl.u32 %v761, 7
        %v763 = vsub.s32 0, %v762
        %v764 = vrot.slane %v760, %v763
        %v766 = vsel %vm340, %v420, 0
        %768 = vmatprep.subr.mxu0 0.0
        %769 = vmatpush1.msra.mxu0 %v756
        %770 = vmatprep.subr.mxu0 0.0
        %771 = vmatpush1.msra.mxu0 %v757
        %772 = vmatprep.subr.mxu0 0.0
        %773 = vmatpush1.msra.mxu0 %v758
        %774 = vmatprep.subr.mxu0 0.0
        %775 = vmatpush1.msra.mxu0 %v759
        %776 = vmatprep.subr.mxu0 0.0
        %777 = vmatpush1.msra.mxu0 0.0
        %778 = vmatprep.subr.mxu0 0.0
        %779 = vmatpush1.msra.mxu0 0.0
        %780 = vmatprep.subr.mxu0 0.0
        %781 = vmatpush1.msra.mxu0 0.0
        %782 = vmatprep.subr.mxu0 0.0
        %783 = vmatpush1.msra.mxu0 0.0
        %784 = vmatprep.subr.mxu0 0.0
        %785 = vmatpush1.msra.mxu0 0.0
        %786 = vmatprep.subr.mxu0 0.0
        %787 = vmatpush1.msra.mxu0 0.0
        %788 = vmatprep.subr.mxu0 0.0
        %789 = vmatpush1.msra.mxu0 0.0
        %790 = vmatprep.subr.mxu0 0.0
        %791 = vmatpush1.msra.mxu0 0.0
        %792 = vmatprep.subr.mxu0 0.0
        %793 = vmatpush1.msra.mxu0 0.0
        %794 = vmatprep.subr.mxu0 0.0
        %795 = vmatpush1.msra.mxu0 0.0
        %796 = vmatprep.subr.mxu0 0.0
        %797 = vmatpush1.msra.mxu0 0.0
        %798 = vmatprep.subr.mxu0 0.0
        %799 = vmatpush1.msra.mxu0 0.0
        %800 = vmatprep.subr.mxu0 0.0
        %801 = vmatpush1.msra.mxu0 0.0
        %802 = vmatprep.subr.mxu0 0.0
        %803 = vmatpush1.msra.mxu0 0.0
        %804 = vmatprep.subr.mxu0 0.0
        %805 = vmatpush1.msra.mxu0 0.0
        %806 = vmatprep.subr.mxu0 0.0
        %807 = vmatpush1.msra.mxu0 0.0
        %808 = vmatprep.subr.mxu0 0.0
        %809 = vmatpush1.msra.mxu0 0.0
        %810 = vmatprep.subr.mxu0 0.0
        %811 = vmatpush1.msra.mxu0 0.0
        %812 = vmatprep.subr.mxu0 0.0
        %813 = vmatpush1.msra.mxu0 0.0
        %814 = vmatprep.subr.mxu0 0.0
        %815 = vmatpush1.msra.mxu0 0.0
        %816 = vmatprep.subr.mxu0 0.0
        %817 = vmatpush1.msra.mxu0 0.0
        %818 = vmatprep.subr.mxu0 0.0
        %819 = vmatpush1.msra.mxu0 0.0
        %820 = vmatprep.subr.mxu0 0.0
        %821 = vmatpush1.msra.mxu0 0.0
        %822 = vmatprep.subr.mxu0 0.0
        %823 = vmatpush1.msra.mxu0 0.0
        %824 = vmatprep.subr.mxu0 0.0
        %825 = vmatpush1.msra.mxu0 0.0
        %826 = vmatprep.subr.mxu0 0.0
        %827 = vmatpush1.msra.mxu0 0.0
        %828 = vmatprep.subr.mxu0 0.0
        %829 = vmatpush1.msra.mxu0 0.0
        %830 = vmatprep.subr.mxu0 0.0
        %831 = vmatpush1.msra.mxu0 0.0
        %832 = vmatprep.mubr.f32.mxu0 0.0
        %833 = vmatmul.mubr.f32.gmra.mrb[0].mxu0 %v766
        %v834 = vpop.f32.mrb[0].mxu0
        %v835 = vadd.f32 %v764, %v834
        %v836 = vpop.f32.mrb[0].mxu0
        %837 = vdwg.mxu0
        %s838 = scalar_lea.vmem %s313, 160
        %v839 = vld [vmem:[%s838] sm:$0xff]
        %v840 = vld [vmem:[%s838 + $0x8] sm:$0xff]
        %v841 = vld [vmem:[%s838 + $0x10] sm:$0xff]
        %v842 = vld [vmem:[%s838 + $0x18] sm:$0xff]
        %v843 = vld [vmem:[%s318 + $0x5] sm:$0x1]
        %v844 = vlaneseq
        %v845 = vshrl.u32 %v844, 7
        %v846 = vsub.s32 0, %v845
        %v847 = vrot.slane %v843, %v846
        %848 = vrot.lane.b32.xlu0 %v420, 96
        %v849 = vpop.permute.xlu0 %848
        %v850 = vsel %vm340, %v849, 0
        %852 = vmatprep.subr.mxu0 0.0
        %853 = vmatpush1.msra.mxu0 %v839
        %854 = vmatprep.subr.mxu0 0.0
        %855 = vmatpush1.msra.mxu0 %v840
        %856 = vmatprep.subr.mxu0 0.0
        %857 = vmatpush1.msra.mxu0 %v841
        %858 = vmatprep.subr.mxu0 0.0
        %859 = vmatpush1.msra.mxu0 %v842
        %860 = vmatprep.subr.mxu0 0.0
        %861 = vmatpush1.msra.mxu0 0.0
        %862 = vmatprep.subr.mxu0 0.0
        %863 = vmatpush1.msra.mxu0 0.0
        %864 = vmatprep.subr.mxu0 0.0
        %865 = vmatpush1.msra.mxu0 0.0
        %866 = vmatprep.subr.mxu0 0.0
        %867 = vmatpush1.msra.mxu0 0.0
        %868 = vmatprep.subr.mxu0 0.0
        %869 = vmatpush1.msra.mxu0 0.0
        %870 = vmatprep.subr.mxu0 0.0
        %871 = vmatpush1.msra.mxu0 0.0
        %872 = vmatprep.subr.mxu0 0.0
        %873 = vmatpush1.msra.mxu0 0.0
        %874 = vmatprep.subr.mxu0 0.0
        %875 = vmatpush1.msra.mxu0 0.0
        %876 = vmatprep.subr.mxu0 0.0
        %877 = vmatpush1.msra.mxu0 0.0
        %878 = vmatprep.subr.mxu0 0.0
        %879 = vmatpush1.msra.mxu0 0.0
        %880 = vmatprep.subr.mxu0 0.0
        %881 = vmatpush1.msra.mxu0 0.0
        %882 = vmatprep.subr.mxu0 0.0
        %883 = vmatpush1.msra.mxu0 0.0
        %884 = vmatprep.subr.mxu0 0.0
        %885 = vmatpush1.msra.mxu0 0.0
        %886 = vmatprep.subr.mxu0 0.0
        %887 = vmatpush1.msra.mxu0 0.0
        %888 = vmatprep.subr.mxu0 0.0
        %889 = vmatpush1.msra.mxu0 0.0
        %890 = vmatprep.subr.mxu0 0.0
        %891 = vmatpush1.msra.mxu0 0.0
        %892 = vmatprep.subr.mxu0 0.0
        %893 = vmatpush1.msra.mxu0 0.0
        %894 = vmatprep.subr.mxu0 0.0
        %895 = vmatpush1.msra.mxu0 0.0
        %896 = vmatprep.subr.mxu0 0.0
        %897 = vmatpush1.msra.mxu0 0.0
        %898 = vmatprep.subr.mxu0 0.0
        %899 = vmatpush1.msra.mxu0 0.0
        %900 = vmatprep.subr.mxu0 0.0
        %901 = vmatpush1.msra.mxu0 0.0
        %902 = vmatprep.subr.mxu0 0.0
        %903 = vmatpush1.msra.mxu0 0.0
        %904 = vmatprep.subr.mxu0 0.0
        %905 = vmatpush1.msra.mxu0 0.0
        %906 = vmatprep.subr.mxu0 0.0
        %907 = vmatpush1.msra.mxu0 0.0
        %908 = vmatprep.subr.mxu0 0.0
        %909 = vmatpush1.msra.mxu0 0.0
        %910 = vmatprep.subr.mxu0 0.0
        %911 = vmatpush1.msra.mxu0 0.0
        %912 = vmatprep.subr.mxu0 0.0
        %913 = vmatpush1.msra.mxu0 0.0
        %914 = vmatprep.subr.mxu0 0.0
        %915 = vmatpush1.msra.mxu0 0.0
        %916 = vmatprep.mubr.f32.mxu0 0.0
        %917 = vmatmul.mubr.f32.gmra.mrb[0].mxu0 %v850
        %v918 = vpop.f32.mrb[0].mxu0
        %v919 = vadd.f32 %v847, %v918
        %v920 = vpop.f32.mrb[0].mxu0
        %921 = vdwg.mxu0
        %s922 = scalar_lea.vmem %s313, 192
        %v923 = vld [vmem:[%s922] sm:$0xff]
        %v924 = vld [vmem:[%s922 + $0x8] sm:$0xff]
        %v925 = vld [vmem:[%s922 + $0x10] sm:$0xff]
        %v926 = vld [vmem:[%s922 + $0x18] sm:$0xff]
        %v927 = vld [vmem:[%s318 + $0x6] sm:$0x1]
        %v928 = vlaneseq
        %v929 = vshrl.u32 %v928, 7
        %v930 = vsub.s32 0, %v929
        %v931 = vrot.slane %v927, %v930
        %932 = vrot.lane.b32.xlu0 %v420, 64
        %v933 = vpop.permute.xlu0 %932
        %v934 = vsel %vm340, %v933, 0
        %936 = vmatprep.subr.mxu0 0.0
        %937 = vmatpush1.msra.mxu0 %v923
        %938 = vmatprep.subr.mxu0 0.0
        %939 = vmatpush1.msra.mxu0 %v924
        %940 = vmatprep.subr.mxu0 0.0
        %941 = vmatpush1.msra.mxu0 %v925
        %942 = vmatprep.subr.mxu0 0.0
        %943 = vmatpush1.msra.mxu0 %v926
        %944 = vmatprep.subr.mxu0 0.0
        %945 = vmatpush1.msra.mxu0 0.0
        %946 = vmatprep.subr.mxu0 0.0
        %947 = vmatpush1.msra.mxu0 0.0
        %948 = vmatprep.subr.mxu0 0.0
        %949 = vmatpush1.msra.mxu0 0.0
        %950 = vmatprep.subr.mxu0 0.0
        %951 = vmatpush1.msra.mxu0 0.0
        %952 = vmatprep.subr.mxu0 0.0
        %953 = vmatpush1.msra.mxu0 0.0
        %954 = vmatprep.subr.mxu0 0.0
        %955 = vmatpush1.msra.mxu0 0.0
        %956 = vmatprep.subr.mxu0 0.0
        %957 = vmatpush1.msra.mxu0 0.0
        %958 = vmatprep.subr.mxu0 0.0
        %959 = vmatpush1.msra.mxu0 0.0
        %960 = vmatprep.subr.mxu0 0.0
        %961 = vmatpush1.msra.mxu0 0.0
        %962 = vmatprep.subr.mxu0 0.0
        %963 = vmatpush1.msra.mxu0 0.0
        %964 = vmatprep.subr.mxu0 0.0
        %965 = vmatpush1.msra.mxu0 0.0
        %966 = vmatprep.subr.mxu0 0.0
        %967 = vmatpush1.msra.mxu0 0.0
        %968 = vmatprep.subr.mxu0 0.0
        %969 = vmatpush1.msra.mxu0 0.0
        %970 = vmatprep.subr.mxu0 0.0
        %971 = vmatpush1.msra.mxu0 0.0
        %972 = vmatprep.subr.mxu0 0.0
        %973 = vmatpush1.msra.mxu0 0.0
        %974 = vmatprep.subr.mxu0 0.0
        %975 = vmatpush1.msra.mxu0 0.0
        %976 = vmatprep.subr.mxu0 0.0
        %977 = vmatpush1.msra.mxu0 0.0
        %978 = vmatprep.subr.mxu0 0.0
        %979 = vmatpush1.msra.mxu0 0.0
        %980 = vmatprep.subr.mxu0 0.0
        %981 = vmatpush1.msra.mxu0 0.0
        %982 = vmatprep.subr.mxu0 0.0
        %983 = vmatpush1.msra.mxu0 0.0
        %984 = vmatprep.subr.mxu0 0.0
        %985 = vmatpush1.msra.mxu0 0.0
        %986 = vmatprep.subr.mxu0 0.0
        %987 = vmatpush1.msra.mxu0 0.0
        %988 = vmatprep.subr.mxu0 0.0
        %989 = vmatpush1.msra.mxu0 0.0
        %990 = vmatprep.subr.mxu0 0.0
        %991 = vmatpush1.msra.mxu0 0.0
        %992 = vmatprep.subr.mxu0 0.0
        %993 = vmatpush1.msra.mxu0 0.0
        %994 = vmatprep.subr.mxu0 0.0
        %995 = vmatpush1.msra.mxu0 0.0
        %996 = vmatprep.subr.mxu0 0.0
        %997 = vmatpush1.msra.mxu0 0.0
        %998 = vmatprep.subr.mxu0 0.0
        %999 = vmatpush1.msra.mxu0 0.0
        %1000 = vmatprep.mubr.f32.mxu0 0.0
        %1001 = vmatmul.mubr.f32.gmra.mrb[0].mxu0 %v934
        %v1002 = vpop.f32.mrb[0].mxu0
        %v1003 = vadd.f32 %v931, %v1002
        %v1004 = vpop.f32.mrb[0].mxu0
        %1005 = vdwg.mxu0
        %s1006 = scalar_lea.vmem %s313, 224
        %v1007 = vld [vmem:[%s1006] sm:$0xff]
        %v1008 = vld [vmem:[%s1006 + $0x8] sm:$0xff]
        %v1009 = vld [vmem:[%s1006 + $0x10] sm:$0xff]
        %v1010 = vld [vmem:[%s1006 + $0x18] sm:$0xff]
        %v1011 = vld [vmem:[%s318 + $0x7] sm:$0x1]
        %v1012 = vlaneseq
        %v1013 = vshrl.u32 %v1012, 7
        %v1014 = vsub.s32 0, %v1013
        %v1015 = vrot.slane %v1011, %v1014
        %1016 = vrot.lane.b32.xlu0 %v420, 32
        %v1017 = vpop.permute.xlu0 %1016
        %v1018 = vsel %vm340, %v1017, 0
        %1020 = vmatprep.subr.mxu0 0.0
        %1021 = vmatpush1.msra.mxu0 %v1007
        %1022 = vmatprep.subr.mxu0 0.0
        %1023 = vmatpush1.msra.mxu0 %v1008
        %1024 = vmatprep.subr.mxu0 0.0
        %1025 = vmatpush1.msra.mxu0 %v1009
        %1026 = vmatprep.subr.mxu0 0.0
        %1027 = vmatpush1.msra.mxu0 %v1010
        %1028 = vmatprep.subr.mxu0 0.0
        %1029 = vmatpush1.msra.mxu0 0.0
        %1030 = vmatprep.subr.mxu0 0.0
        %1031 = vmatpush1.msra.mxu0 0.0
        %1032 = vmatprep.subr.mxu0 0.0
        %1033 = vmatpush1.msra.mxu0 0.0
        %1034 = vmatprep.subr.mxu0 0.0
        %1035 = vmatpush1.msra.mxu0 0.0
        %1036 = vmatprep.subr.mxu0 0.0
        %1037 = vmatpush1.msra.mxu0 0.0
        %1038 = vmatprep.subr.mxu0 0.0
        %1039 = vmatpush1.msra.mxu0 0.0
        %1040 = vmatprep.subr.mxu0 0.0
        %1041 = vmatpush1.msra.mxu0 0.0
        %1042 = vmatprep.subr.mxu0 0.0
        %1043 = vmatpush1.msra.mxu0 0.0
        %1044 = vmatprep.subr.mxu0 0.0
        %1045 = vmatpush1.msra.mxu0 0.0
        %1046 = vmatprep.subr.mxu0 0.0
        %1047 = vmatpush1.msra.mxu0 0.0
        %1048 = vmatprep.subr.mxu0 0.0
        %1049 = vmatpush1.msra.mxu0 0.0
        %1050 = vmatprep.subr.mxu0 0.0
        %1051 = vmatpush1.msra.mxu0 0.0
        %1052 = vmatprep.subr.mxu0 0.0
        %1053 = vmatpush1.msra.mxu0 0.0
        %1054 = vmatprep.subr.mxu0 0.0
        %1055 = vmatpush1.msra.mxu0 0.0
        %1056 = vmatprep.subr.mxu0 0.0
        %1057 = vmatpush1.msra.mxu0 0.0
        %1058 = vmatprep.subr.mxu0 0.0
        %1059 = vmatpush1.msra.mxu0 0.0
        %1060 = vmatprep.subr.mxu0 0.0
        %1061 = vmatpush1.msra.mxu0 0.0
        %1062 = vmatprep.subr.mxu0 0.0
        %1063 = vmatpush1.msra.mxu0 0.0
        %1064 = vmatprep.subr.mxu0 0.0
        %1065 = vmatpush1.msra.mxu0 0.0
        %1066 = vmatprep.subr.mxu0 0.0
        %1067 = vmatpush1.msra.mxu0 0.0
        %1068 = vmatprep.subr.mxu0 0.0
        %1069 = vmatpush1.msra.mxu0 0.0
        %1070 = vmatprep.subr.mxu0 0.0
        %1071 = vmatpush1.msra.mxu0 0.0
        %1072 = vmatprep.subr.mxu0 0.0
        %1073 = vmatpush1.msra.mxu0 0.0
        %1074 = vmatprep.subr.mxu0 0.0
        %1075 = vmatpush1.msra.mxu0 0.0
        %1076 = vmatprep.subr.mxu0 0.0
        %1077 = vmatpush1.msra.mxu0 0.0
        %1078 = vmatprep.subr.mxu0 0.0
        %1079 = vmatpush1.msra.mxu0 0.0
        %1080 = vmatprep.subr.mxu0 0.0
        %1081 = vmatpush1.msra.mxu0 0.0
        %1082 = vmatprep.subr.mxu0 0.0
        %1083 = vmatpush1.msra.mxu0 0.0
        %1084 = vmatprep.mubr.f32.mxu0 0.0
        %1085 = vmatmul.mubr.f32.gmra.mrb[0].mxu0 %v1018
        %v1086 = vpop.f32.mrb[0].mxu0
        %v1087 = vadd.f32 %v1015, %v1086
        %v1088 = vpop.f32.mrb[0].mxu0
        %1089 = vdwg.mxu0
        %1091 = vrot.lane.b32.xlu0 %v584, 16
        %v1092 = vpop.permute.xlu0 %1091
        %1095 = vrot.lane.b32.xlu0 %v668, 32
        %v1096 = vpop.permute.xlu0 %1095
        %1099 = vrot.lane.b32.xlu0 %v752, 48
        %v1100 = vpop.permute.xlu0 %1099
        %1103 = vrot.lane.b32.xlu0 %v835, 64
        %v1104 = vpop.permute.xlu0 %1103
        %1107 = vrot.lane.b32.xlu0 %v919, 80
        %v1108 = vpop.permute.xlu0 %1107
        %1111 = vrot.lane.b32.xlu0 %v1003, 96
        %v1112 = vpop.permute.xlu0 %1111
        %1115 = vrot.lane.b32.xlu0 %v1087, 112
        %v1116 = vpop.permute.xlu0 %1115
        %vm1118 = vcmask 130048
        %v1119 = vsel %vm1118, %v500, %v1092
        %v1120 = vsel %vm340, %v1119, %v1096
        %vm1121 = vcmask 392192
        %v1122 = vsel %vm1121, %v1120, %v1100
        %vm1123 = vcmask 523264
        %v1124 = vsel %vm1123, %v1122, %v1104
        %vm1125 = vcmask 654336
        %v1126 = vsel %vm1125, %v1124, %v1108
        %vm1127 = vcmask 785408
        %v1128 = vsel %vm1127, %v1126, %v1112
        %vm1129 = vcmask 916480
        %v1130 = vsel %vm1129, %v1128, %v1116
        %1131 = vst [vmem:[%s301] sm:$0x3] %v1130
        %s1132 = sand.u32 %s152, 1
        %s1133 = scalar_lea.sflag [#allocation4], %s1132
        %s1134 = sand.u32 %s152, 1
        %s1135 = smul.addr %s1134, 2
        %s1136 = scalar_lea.vmem [#allocation3], %s1135
        // Predicated region
        $region64: #{tpu_custom_call.1} parent=58 // pred_check
          %p1137 = pneg %p162
        $region65: #{tpu_custom_call.1} parent=58 // pred_check_branch
          %1139 = sbr.rel (%p1137) target = $region67
        $region66: #{tpu_custom_call.1} parent=58 // pred_region
          %s1141 = ssub.s32 32, 32
          %1142 = vsyncadd %s1133, %s1141
          %s1143 = smul.addr %s19, 32
          %s1144 = scalar_lea.hbm %s5, %s1143
          %s1146 = sshll.u32 %s1136, 4
          %s1147 = int_to_ptr.vmem [resolvable:$true] %s1146
          %1149 = dma.vmem_to_hbm [thread:$0]  %s1147, 32, %s1144, %s1133
        $region67: #{tpu_custom_call.1} parent=58 // pred_fallthru
          _
      $region59: #{tpu_custom_call.1} parent=5 // pred_fallthru
        _
      %p1150 = scmp.le.s32.totalorder 2, %s14
      // Predicated region
      $region68: #{tpu_custom_call.1} parent=5 // pred_check
        %p1151 = pneg %p1150
      $region69: #{tpu_custom_call.1} parent=5 // pred_check_branch
        %1153 = sbr.rel (%p1151) target = $region71
      $region70: #{tpu_custom_call.1} parent=5 // pred_region
        %s1154 = ssub.s32 %s14, 2
        // Predicated region
        $region72: #{tpu_custom_call.1} parent=70 // pred_check
          %p1155 = pneg %p168
        $region73: #{tpu_custom_call.1} parent=70 // pred_check_branch
          %1157 = sbr.rel (%p1155) target = $region75
        $region74: #{tpu_custom_call.1} parent=70 // pred_region
          %s1158 = sand.u32 %s153, 1
          %s1159 = scalar_lea.sflag [#allocation4], %s1158
          %s1160 = sand.u32 %s153, 1
          %s1161 = smul.addr %s1160, 2
          %s1162 = scalar_lea.vmem [#allocation3], %s1161
          %1163 = dma.done %s1159, 32
        $region75: #{tpu_custom_call.1} parent=70 // pred_fallthru
          _
      $region71: #{tpu_custom_call.1} parent=5 // pred_fallthru
        _
    $region6: #{tpu_custom_call.1} parent=1 // loop_footer
      %s18 = sadd.s32 1, %s14
    $region7: #{tpu_custom_call.1} parent=1 // loop_footer_branch
      %13 = sbr.rel target = $region3
    $region8: #{tpu_custom_call.1} parent=1 // loop_exit
      _
    %1164 = vsyncpa [#allocation4], 1
    %s1165 = scalar_lea.sflag [#allocation4], 1
    %1166 = vsyncpa %s1165, 1

</llo_original>
